<compile_context>
chip_gen: v7x
topology: tpu7x:2x2x1
jax: 0.10.0
libtpu: 0.0.40
codegen_flags: <defaults>
</compile_context>

<pallas_src>
import jax
import jax.numpy as jnp
from jax import lax
from jax.experimental import pallas as pl
from jax.experimental.pallas import tpu as pltpu


def _round_up(x, m):
    return ((x + m - 1) // m) * m


def fusion_kernel(w_ref, x_ref, out_ref):
    """Fused Fusionmodel forward on one batch tile.

    w_ref  : SMEM (3, 23) f32   row j = [w1[j,0:15], b1[j], w2[j,0:6], b2[j]]
    x_ref  : VMEM (18, SB, 128) rows 0..2  = whole_feature,
                                rows 3..17 = cat(l_eye, l_lips, nose, r_eye, r_lips)
    out_ref: VMEM (3,  SB, 128)
    """
    sb = x_ref.shape[1]
    # One fully-packed vreg per feature per chunk: 16 sublanes for 2-byte I/O
    # (bf16 packs 2 rows/sublane), 8 for f32.
    sbc = 16 if jnp.dtype(x_ref.dtype).itemsize == 2 else 8
    if sb % sbc:
        sbc = 8
    n_chunks = sb // sbc

    # Hoist all 66 scalar weight reads out of the chunk loop (loop-invariant).
    w1 = [[w_ref[j, k] for k in range(15)] for j in range(3)]
    b1 = [w_ref[j, 15] for j in range(3)]
    w2 = [[w_ref[j, 16 + c] for c in range(6)] for j in range(3)]
    b2 = [w_ref[j, 22] for j in range(3)]

    def chunk_body(c):
        base = pl.multiple_of(c * sbc, sbc)
        sl = pl.ds(base, sbc)

        def feat(i):                       # (sbc, 128) dense vreg, f32 accumulation
            return x_ref[i, sl, :].astype(jnp.float32)

        # --- fc_2 contribution from relu(whole_feature) (rows 0..2) FIRST, so
        # the three whole-feature vregs retire before fc1 raises pressure.
        xw = [jnp.maximum(feat(i), 0.0) for i in range(3)]
        acc2 = [(xw[0] * w2[j][0] + xw[1] * w2[j][1])
                + (xw[2] * w2[j][2] + b2[j]) for j in range(3)]

        # --- fc1 (15 -> 3) + ReLU, streaming: load each part-feature once and
        # FMA into two partial accumulators per output (6 independent chains;
        # dependent-add depth ~7+1 instead of 14). Keeps live vregs ~10.
        acc1 = [[None, None] for _ in range(3)]
        for k in range(15):
            xk = feat(3 + k)
            s = k & 1
            for j in range(3):
                p = xk * w1[j][k]
                acc1[j][s] = p if acc1[j][s] is None else acc1[j][s] + p
        h = [jnp.maximum((acc1[j][0] + acc1[j][1]) + b1[j], 0.0)
             for j in range(3)]
        # TODO(synk): Dropout(p=0.5) is identity (eval mode); BatchNorm1d bn1 is
        # declared in __init__ but never used in forward, so it is omitted.

        # --- fc_2 tail: relu(h) == h, add hidden contribution, store lane-dense.
        for j in range(3):
            r = acc2[j] + ((h[0] * w2[j][3] + h[1] * w2[j][4]) + h[2] * w2[j][5])
            out_ref[j, sl, :] = r.astype(out_ref.dtype)

    def chunk(c, carry):
        chunk_body(c)
        return carry

    # Unroll the short chunk loop so the LLO scheduler can interleave chains
    # from adjacent chunks (docs: visible un-unrolled fori_loop costs ~35%).
    unroll = n_chunks if n_chunks <= 4 else 2
    lax.fori_loop(0, n_chunks, chunk, 0, unroll=unroll)


def fusion_forward_pallas(params, whole, l_eye, l_lips, nose, r_eye, r_lips,
                          *, sb_blk=None, io_dtype=jnp.bfloat16, buffers=2,
                          feature_major_out=False):
    """Pallas forward. Batch tile = sb_blk * 128 elements.

    Per-step VMEM at the caps (sb_blk=512 f32 or 1024 bf16): in 4.5 MiB +
    out 0.75 MiB, double-buffered ~10.5 MiB -> fits the DEFAULT scoped VMEM of
    v5e (16 MiB) and v6e/v7x (32 MiB); no vmem_limit_bytes override needed.
    """
    B = whole.shape[0]
    io_dtype = whole.dtype if io_dtype is None else jnp.dtype(io_dtype)
    itemsize = jnp.dtype(io_dtype).itemsize
    sbc = 16 if itemsize == 2 else 8

    if sb_blk is None:
        cap = 1024 if itemsize == 2 else 512
        # Aim for >= 8 grid steps: shards the ("parallel",) axis across both
        # TensorCores on v7x and keeps the pad-to-tile factor small at low B.
        want = pl.cdiv(pl.cdiv(B, 8), 128)
        sb_blk = max(sbc, min(cap, _round_up(want, sbc)))
    else:
        sb_blk = max(sbc, _round_up(sb_blk, sbc))

    # One packed, lane-dense activation slab: [18, Bp/128, 128].
    # Cast to io_dtype BEFORE transpose/concat so these wrapper-side XLA
    # passes move half the bytes when io_dtype is bf16.
    parts = [whole, l_eye, l_lips, nose, r_eye, r_lips]
    act = jnp.concatenate([p.astype(io_dtype).T for p in parts], axis=0)  # [18, B]
    blk_batch = sb_blk * 128
    n_blk = pl.cdiv(B, blk_batch)
    Bp = n_blk * blk_batch
    if Bp != B:
        # Padded tail rows compute bias-only garbage that is sliced off below;
        # never reduce over the padded region.
        act = jnp.pad(act, ((0, 0), (0, Bp - B)))
    S = Bp // 128
    act = act.reshape(18, S, 128)

    # One packed weight slab for SMEM: row j = [w1[j,:], b1[j], w2[j,:], b2[j]].
    w1, b1, w2, b2 = params["w1"], params["b1"], params["w2"], params["b2"]
    w_slab = jnp.concatenate(
        [w1, b1[:, None], w2, b2[:, None]], axis=1).astype(jnp.float32)  # (3, 23)

    act_spec_kwargs = {}
    if buffers != 2:
        # Optional 3-deep pipelining if a trace shows exposed DMA at step edges.
        act_spec_kwargs["pipeline_mode"] = pl.Buffered(buffers)
    act_spec = pl.BlockSpec((18, sb_blk, 128), lambda i: (0, i, 0),
                            **act_spec_kwargs)

    out = pl.pallas_call(
        fusion_kernel,
        out_shape=jax.ShapeDtypeStruct((3, S, 128), io_dtype),
        grid=(n_blk,),
        in_specs=[
            pl.BlockSpec(memory_space=pltpu.MemorySpace.SMEM),   # weight slab
            act_spec,                                            # activations
        ],
        out_specs=pl.BlockSpec((3, sb_blk, 128), lambda i: (0, i, 0)),
        compiler_params=pltpu.CompilerParams(
            dimension_semantics=("parallel",)),
    )(w_slab, act)

    out3b = out.reshape(3, Bp)[:, :B]
    if feature_major_out:
        # Cheaper contract for downstream consumers that accept [3, B].
        return out3b.astype(whole.dtype)
    return out3b.T.astype(whole.dtype)


def fusion_forward_reference(params, whole, l_eye, l_lips, nose, r_eye, r_lips):
    x5 = jnp.concatenate([l_eye, l_lips, nose, r_eye, r_lips], axis=1)
    h = jnp.maximum(x5 @ params["w1"].T + params["b1"], 0.0)
    z = jnp.maximum(jnp.concatenate([whole, h], axis=1), 0.0)
    return z @ params["w2"].T + params["b2"]


def fusion_forward(params, whole, l_eye, l_lips, nose, r_eye, r_lips,
                   *, pallas_min_batch=16384, **kwargs):
    # At small/medium batch the pallas_call fixed cost + wrapper layout passes
    # dominate the ~1e2 FLOPs/row of work, so let XLA fuse the two tiny GEMMs.
    if whole.shape[0] < pallas_min_batch:
        return fusion_forward_reference(params, whole, l_eye, l_lips, nose,
                                        r_eye, r_lips)
    return fusion_forward_pallas(params, whole, l_eye, l_lips, nose,
                                 r_eye, r_lips, **kwargs)


def init_params(key):
    k1, k2, k3, k4 = jax.random.split(key, 4)
    # Deterministic synthetic init (uniform, torch-Linear-like fan-in scaling).
    w1 = jax.random.uniform(k1, (3, 15), jnp.float32, -1.0, 1.0) / jnp.sqrt(15.0)
    b1 = jax.random.uniform(k2, (3,), jnp.float32, -1.0, 1.0) / jnp.sqrt(15.0)
    w2 = jax.random.uniform(k3, (3, 6), jnp.float32, -1.0, 1.0) / jnp.sqrt(6.0)
    b2 = jax.random.uniform(k4, (3,), jnp.float32, -1.0, 1.0) / jnp.sqrt(6.0)
    return {"w1": w1, "b1": b1, "w2": w2, "b2": b2}


if __name__ == "__main__":
    key = jax.random.PRNGKey(0)
    pkey, dkey = jax.random.split(key)
    params = init_params(pkey)

    B = 2053  # not a tile multiple -> exercises padding + a multi-step grid
    ks = jax.random.split(dkey, 6)
    feats = [jax.random.normal(ks[i], (B, 3), jnp.float32) for i in range(6)]

    ref = fusion_forward_reference(params, *feats)

    # f32 I/O path: bit-near the reference (tight tolerance).
    out_f32 = jax.block_until_ready(
        fusion_forward_pallas(params, *feats, io_dtype=jnp.float32))
    assert out_f32.shape == (B, 3)
    assert jnp.allclose(out_f32, ref, atol=1e-4, rtol=1e-4), \
        float(jnp.max(jnp.abs(out_f32 - ref)))

    # bf16 I/O path (the perf default): inputs are cast to bf16 before the
    # matvecs (f32 accumulation in-kernel), so use a looser tolerance.
    out_bf16 = jax.block_until_ready(fusion_forward_pallas(params, *feats))
    assert out_bf16.shape == (B, 3)
    assert jnp.allclose(out_bf16, ref, atol=5e-2, rtol=5e-2), \
        float(jnp.max(jnp.abs(out_bf16 - ref)))

    print("KERNEL_OK")
</pallas_src>

<mosaic_0001>
module attributes {stable_mosaic.version = 11 : i64} {
  func.func @fusion_kernel(%arg0: i32, %arg1: memref<3x23xf32, #tpu.memory_space<smem>>, %arg2: memref<18x8x128xf32, #tpu.memory_space<vmem>>, %arg3: memref<3x8x128xf32, #tpu.memory_space<vmem>>) attributes {dimension_semantics = [#tpu.dimension_semantics<parallel>], iteration_bounds = array<i64: 3>, scalar_prefetch = 0 : i64, scratch_operands = 0 : i64, tpu.core_type = #tpu.core_type<tc>, window_params = [{transform_indices = @transform_0, window_bounds = array<i64: 3, 23>}, {transform_indices = @transform_1, window_bounds = array<i64: 18, 8, 128>}, {transform_indices = @transform_2, window_bounds = array<i64: 3, 8, 128>}]} {
    %c0 = arith.constant 0 : index
    %c0_0 = arith.constant 0 : index
    %0 = memref.load %arg1[%c0, %c0_0] : memref<3x23xf32, #tpu.memory_space<smem>>
    %c0_1 = arith.constant 0 : index
    %c1 = arith.constant 1 : index
    %1 = memref.load %arg1[%c0_1, %c1] : memref<3x23xf32, #tpu.memory_space<smem>>
    %c0_2 = arith.constant 0 : index
    %c2 = arith.constant 2 : index
    %2 = memref.load %arg1[%c0_2, %c2] : memref<3x23xf32, #tpu.memory_space<smem>>
    %c0_3 = arith.constant 0 : index
    %c3 = arith.constant 3 : index
    %3 = memref.load %arg1[%c0_3, %c3] : memref<3x23xf32, #tpu.memory_space<smem>>
    %c0_4 = arith.constant 0 : index
    %c4 = arith.constant 4 : index
    %4 = memref.load %arg1[%c0_4, %c4] : memref<3x23xf32, #tpu.memory_space<smem>>
    %c0_5 = arith.constant 0 : index
    %c5 = arith.constant 5 : index
    %5 = memref.load %arg1[%c0_5, %c5] : memref<3x23xf32, #tpu.memory_space<smem>>
    %c0_6 = arith.constant 0 : index
    %c6 = arith.constant 6 : index
    %6 = memref.load %arg1[%c0_6, %c6] : memref<3x23xf32, #tpu.memory_space<smem>>
    %c0_7 = arith.constant 0 : index
    %c7 = arith.constant 7 : index
    %7 = memref.load %arg1[%c0_7, %c7] : memref<3x23xf32, #tpu.memory_space<smem>>
    %c0_8 = arith.constant 0 : index
    %c8 = arith.constant 8 : index
    %8 = memref.load %arg1[%c0_8, %c8] : memref<3x23xf32, #tpu.memory_space<smem>>
    %c0_9 = arith.constant 0 : index
    %c9 = arith.constant 9 : index
    %9 = memref.load %arg1[%c0_9, %c9] : memref<3x23xf32, #tpu.memory_space<smem>>
    %c0_10 = arith.constant 0 : index
    %c10 = arith.constant 10 : index
    %10 = memref.load %arg1[%c0_10, %c10] : memref<3x23xf32, #tpu.memory_space<smem>>
    %c0_11 = arith.constant 0 : index
    %c11 = arith.constant 11 : index
    %11 = memref.load %arg1[%c0_11, %c11] : memref<3x23xf32, #tpu.memory_space<smem>>
    %c0_12 = arith.constant 0 : index
    %c12 = arith.constant 12 : index
    %12 = memref.load %arg1[%c0_12, %c12] : memref<3x23xf32, #tpu.memory_space<smem>>
    %c0_13 = arith.constant 0 : index
    %c13 = arith.constant 13 : index
    %13 = memref.load %arg1[%c0_13, %c13] : memref<3x23xf32, #tpu.memory_space<smem>>
    %c0_14 = arith.constant 0 : index
    %c14 = arith.constant 14 : index
    %14 = memref.load %arg1[%c0_14, %c14] : memref<3x23xf32, #tpu.memory_space<smem>>
    %c1_15 = arith.constant 1 : index
    %c0_16 = arith.constant 0 : index
    %15 = memref.load %arg1[%c1_15, %c0_16] : memref<3x23xf32, #tpu.memory_space<smem>>
    %c1_17 = arith.constant 1 : index
    %c1_18 = arith.constant 1 : index
    %16 = memref.load %arg1[%c1_17, %c1_18] : memref<3x23xf32, #tpu.memory_space<smem>>
    %c1_19 = arith.constant 1 : index
    %c2_20 = arith.constant 2 : index
    %17 = memref.load %arg1[%c1_19, %c2_20] : memref<3x23xf32, #tpu.memory_space<smem>>
    %c1_21 = arith.constant 1 : index
    %c3_22 = arith.constant 3 : index
    %18 = memref.load %arg1[%c1_21, %c3_22] : memref<3x23xf32, #tpu.memory_space<smem>>
    %c1_23 = arith.constant 1 : index
    %c4_24 = arith.constant 4 : index
    %19 = memref.load %arg1[%c1_23, %c4_24] : memref<3x23xf32, #tpu.memory_space<smem>>
    %c1_25 = arith.constant 1 : index
    %c5_26 = arith.constant 5 : index
    %20 = memref.load %arg1[%c1_25, %c5_26] : memref<3x23xf32, #tpu.memory_space<smem>>
    %c1_27 = arith.constant 1 : index
    %c6_28 = arith.constant 6 : index
    %21 = memref.load %arg1[%c1_27, %c6_28] : memref<3x23xf32, #tpu.memory_space<smem>>
    %c1_29 = arith.constant 1 : index
    %c7_30 = arith.constant 7 : index
    %22 = memref.load %arg1[%c1_29, %c7_30] : memref<3x23xf32, #tpu.memory_space<smem>>
    %c1_31 = arith.constant 1 : index
    %c8_32 = arith.constant 8 : index
    %23 = memref.load %arg1[%c1_31, %c8_32] : memref<3x23xf32, #tpu.memory_space<smem>>
    %c1_33 = arith.constant 1 : index
    %c9_34 = arith.constant 9 : index
    %24 = memref.load %arg1[%c1_33, %c9_34] : memref<3x23xf32, #tpu.memory_space<smem>>
    %c1_35 = arith.constant 1 : index
    %c10_36 = arith.constant 10 : index
    %25 = memref.load %arg1[%c1_35, %c10_36] : memref<3x23xf32, #tpu.memory_space<smem>>
    %c1_37 = arith.constant 1 : index
    %c11_38 = arith.constant 11 : index
    %26 = memref.load %arg1[%c1_37, %c11_38] : memref<3x23xf32, #tpu.memory_space<smem>>
    %c1_39 = arith.constant 1 : index
    %c12_40 = arith.constant 12 : index
    %27 = memref.load %arg1[%c1_39, %c12_40] : memref<3x23xf32, #tpu.memory_space<smem>>
    %c1_41 = arith.constant 1 : index
    %c13_42 = arith.constant 13 : index
    %28 = memref.load %arg1[%c1_41, %c13_42] : memref<3x23xf32, #tpu.memory_space<smem>>
    %c1_43 = arith.constant 1 : index
    %c14_44 = arith.constant 14 : index
    %29 = memref.load %arg1[%c1_43, %c14_44] : memref<3x23xf32, #tpu.memory_space<smem>>
    %c2_45 = arith.constant 2 : index
    %c0_46 = arith.constant 0 : index
    %30 = memref.load %arg1[%c2_45, %c0_46] : memref<3x23xf32, #tpu.memory_space<smem>>
    %c2_47 = arith.constant 2 : index
    %c1_48 = arith.constant 1 : index
    %31 = memref.load %arg1[%c2_47, %c1_48] : memref<3x23xf32, #tpu.memory_space<smem>>
    %c2_49 = arith.constant 2 : index
    %c2_50 = arith.constant 2 : index
    %32 = memref.load %arg1[%c2_49, %c2_50] : memref<3x23xf32, #tpu.memory_space<smem>>
    %c2_51 = arith.constant 2 : index
    %c3_52 = arith.constant 3 : index
    %33 = memref.load %arg1[%c2_51, %c3_52] : memref<3x23xf32, #tpu.memory_space<smem>>
    %c2_53 = arith.constant 2 : index
    %c4_54 = arith.constant 4 : index
    %34 = memref.load %arg1[%c2_53, %c4_54] : memref<3x23xf32, #tpu.memory_space<smem>>
    %c2_55 = arith.constant 2 : index
    %c5_56 = arith.constant 5 : index
    %35 = memref.load %arg1[%c2_55, %c5_56] : memref<3x23xf32, #tpu.memory_space<smem>>
    %c2_57 = arith.constant 2 : index
    %c6_58 = arith.constant 6 : index
    %36 = memref.load %arg1[%c2_57, %c6_58] : memref<3x23xf32, #tpu.memory_space<smem>>
    %c2_59 = arith.constant 2 : index
    %c7_60 = arith.constant 7 : index
    %37 = memref.load %arg1[%c2_59, %c7_60] : memref<3x23xf32, #tpu.memory_space<smem>>
    %c2_61 = arith.constant 2 : index
    %c8_62 = arith.constant 8 : index
    %38 = memref.load %arg1[%c2_61, %c8_62] : memref<3x23xf32, #tpu.memory_space<smem>>
    %c2_63 = arith.constant 2 : index
    %c9_64 = arith.constant 9 : index
    %39 = memref.load %arg1[%c2_63, %c9_64] : memref<3x23xf32, #tpu.memory_space<smem>>
    %c2_65 = arith.constant 2 : index
    %c10_66 = arith.constant 10 : index
    %40 = memref.load %arg1[%c2_65, %c10_66] : memref<3x23xf32, #tpu.memory_space<smem>>
    %c2_67 = arith.constant 2 : index
    %c11_68 = arith.constant 11 : index
    %41 = memref.load %arg1[%c2_67, %c11_68] : memref<3x23xf32, #tpu.memory_space<smem>>
    %c2_69 = arith.constant 2 : index
    %c12_70 = arith.constant 12 : index
    %42 = memref.load %arg1[%c2_69, %c12_70] : memref<3x23xf32, #tpu.memory_space<smem>>
    %c2_71 = arith.constant 2 : index
    %c13_72 = arith.constant 13 : index
    %43 = memref.load %arg1[%c2_71, %c13_72] : memref<3x23xf32, #tpu.memory_space<smem>>
    %c2_73 = arith.constant 2 : index
    %c14_74 = arith.constant 14 : index
    %44 = memref.load %arg1[%c2_73, %c14_74] : memref<3x23xf32, #tpu.memory_space<smem>>
    %c0_75 = arith.constant 0 : index
    %c15 = arith.constant 15 : index
    %45 = memref.load %arg1[%c0_75, %c15] : memref<3x23xf32, #tpu.memory_space<smem>>
    %c1_76 = arith.constant 1 : index
    %c15_77 = arith.constant 15 : index
    %46 = memref.load %arg1[%c1_76, %c15_77] : memref<3x23xf32, #tpu.memory_space<smem>>
    %c2_78 = arith.constant 2 : index
    %c15_79 = arith.constant 15 : index
    %47 = memref.load %arg1[%c2_78, %c15_79] : memref<3x23xf32, #tpu.memory_space<smem>>
    %c0_80 = arith.constant 0 : index
    %c16 = arith.constant 16 : index
    %48 = memref.load %arg1[%c0_80, %c16] : memref<3x23xf32, #tpu.memory_space<smem>>
    %c0_81 = arith.constant 0 : index
    %c17 = arith.constant 17 : index
    %49 = memref.load %arg1[%c0_81, %c17] : memref<3x23xf32, #tpu.memory_space<smem>>
    %c0_82 = arith.constant 0 : index
    %c18 = arith.constant 18 : index
    %50 = memref.load %arg1[%c0_82, %c18] : memref<3x23xf32, #tpu.memory_space<smem>>
    %c0_83 = arith.constant 0 : index
    %c19 = arith.constant 19 : index
    %51 = memref.load %arg1[%c0_83, %c19] : memref<3x23xf32, #tpu.memory_space<smem>>
    %c0_84 = arith.constant 0 : index
    %c20 = arith.constant 20 : index
    %52 = memref.load %arg1[%c0_84, %c20] : memref<3x23xf32, #tpu.memory_space<smem>>
    %c0_85 = arith.constant 0 : index
    %c21 = arith.constant 21 : index
    %53 = memref.load %arg1[%c0_85, %c21] : memref<3x23xf32, #tpu.memory_space<smem>>
    %c1_86 = arith.constant 1 : index
    %c16_87 = arith.constant 16 : index
    %54 = memref.load %arg1[%c1_86, %c16_87] : memref<3x23xf32, #tpu.memory_space<smem>>
    %c1_88 = arith.constant 1 : index
    %c17_89 = arith.constant 17 : index
    %55 = memref.load %arg1[%c1_88, %c17_89] : memref<3x23xf32, #tpu.memory_space<smem>>
    %c1_90 = arith.constant 1 : index
    %c18_91 = arith.constant 18 : index
    %56 = memref.load %arg1[%c1_90, %c18_91] : memref<3x23xf32, #tpu.memory_space<smem>>
    %c1_92 = arith.constant 1 : index
    %c19_93 = arith.constant 19 : index
    %57 = memref.load %arg1[%c1_92, %c19_93] : memref<3x23xf32, #tpu.memory_space<smem>>
    %c1_94 = arith.constant 1 : index
    %c20_95 = arith.constant 20 : index
    %58 = memref.load %arg1[%c1_94, %c20_95] : memref<3x23xf32, #tpu.memory_space<smem>>
    %c1_96 = arith.constant 1 : index
    %c21_97 = arith.constant 21 : index
    %59 = memref.load %arg1[%c1_96, %c21_97] : memref<3x23xf32, #tpu.memory_space<smem>>
    %c2_98 = arith.constant 2 : index
    %c16_99 = arith.constant 16 : index
    %60 = memref.load %arg1[%c2_98, %c16_99] : memref<3x23xf32, #tpu.memory_space<smem>>
    %c2_100 = arith.constant 2 : index
    %c17_101 = arith.constant 17 : index
    %61 = memref.load %arg1[%c2_100, %c17_101] : memref<3x23xf32, #tpu.memory_space<smem>>
    %c2_102 = arith.constant 2 : index
    %c18_103 = arith.constant 18 : index
    %62 = memref.load %arg1[%c2_102, %c18_103] : memref<3x23xf32, #tpu.memory_space<smem>>
    %c2_104 = arith.constant 2 : index
    %c19_105 = arith.constant 19 : index
    %63 = memref.load %arg1[%c2_104, %c19_105] : memref<3x23xf32, #tpu.memory_space<smem>>
    %c2_106 = arith.constant 2 : index
    %c20_107 = arith.constant 20 : index
    %64 = memref.load %arg1[%c2_106, %c20_107] : memref<3x23xf32, #tpu.memory_space<smem>>
    %c2_108 = arith.constant 2 : index
    %c21_109 = arith.constant 21 : index
    %65 = memref.load %arg1[%c2_108, %c21_109] : memref<3x23xf32, #tpu.memory_space<smem>>
    %c0_110 = arith.constant 0 : index
    %c22 = arith.constant 22 : index
    %66 = memref.load %arg1[%c0_110, %c22] : memref<3x23xf32, #tpu.memory_space<smem>>
    %c1_111 = arith.constant 1 : index
    %c22_112 = arith.constant 22 : index
    %67 = memref.load %arg1[%c1_111, %c22_112] : memref<3x23xf32, #tpu.memory_space<smem>>
    %c2_113 = arith.constant 2 : index
    %c22_114 = arith.constant 22 : index
    %68 = memref.load %arg1[%c2_113, %c22_114] : memref<3x23xf32, #tpu.memory_space<smem>>
    %c0_i32 = arith.constant 0 : i32
    %c8_i32 = arith.constant 8 : i32
    %69 = arith.muli %c0_i32, %c8_i32 : i32
    %70 = tpu.assume_multiple %69, 8 : i32
    %c0_115 = arith.constant 0 : index
    %71 = arith.index_cast %70 : i32 to index
    %c0_116 = arith.constant 0 : index
    %72 = vector.load %arg2[%c0_115, %71, %c0_116] : memref<18x8x128xf32, #tpu.memory_space<vmem>>, vector<1x8x128xf32>
    %73 = vector.shape_cast %72 : vector<1x8x128xf32> to vector<8x128xf32>
    %cst = arith.constant 0.000000e+00 : f32
    %74 = vector.broadcast %cst : f32 to vector<8x128xf32>
    %75 = arith.maximumf %73, %74 : vector<8x128xf32>
    %c1_117 = arith.constant 1 : index
    %76 = arith.index_cast %70 : i32 to index
    %c0_118 = arith.constant 0 : index
    %77 = vector.load %arg2[%c1_117, %76, %c0_118] : memref<18x8x128xf32, #tpu.memory_space<vmem>>, vector<1x8x128xf32>
    %78 = vector.shape_cast %77 : vector<1x8x128xf32> to vector<8x128xf32>
    %cst_119 = arith.constant 0.000000e+00 : f32
    %79 = vector.broadcast %cst_119 : f32 to vector<8x128xf32>
    %80 = arith.maximumf %78, %79 : vector<8x128xf32>
    %c2_120 = arith.constant 2 : index
    %81 = arith.index_cast %70 : i32 to index
    %c0_121 = arith.constant 0 : index
    %82 = vector.load %arg2[%c2_120, %81, %c0_121] : memref<18x8x128xf32, #tpu.memory_space<vmem>>, vector<1x8x128xf32>
    %83 = vector.shape_cast %82 : vector<1x8x128xf32> to vector<8x128xf32>
    %cst_122 = arith.constant 0.000000e+00 : f32
    %84 = vector.broadcast %cst_122 : f32 to vector<8x128xf32>
    %85 = arith.maximumf %83, %84 : vector<8x128xf32>
    %86 = vector.broadcast %48 : f32 to vector<8x128xf32>
    %87 = arith.mulf %75, %86 : vector<8x128xf32>
    %88 = vector.broadcast %49 : f32 to vector<8x128xf32>
    %89 = arith.mulf %80, %88 : vector<8x128xf32>
    %90 = arith.addf %87, %89 : vector<8x128xf32>
    %91 = vector.broadcast %50 : f32 to vector<8x128xf32>
    %92 = arith.mulf %85, %91 : vector<8x128xf32>
    %93 = vector.broadcast %66 : f32 to vector<8x128xf32>
    %94 = arith.addf %92, %93 : vector<8x128xf32>
    %95 = arith.addf %90, %94 : vector<8x128xf32>
    %96 = vector.broadcast %54 : f32 to vector<8x128xf32>
    %97 = arith.mulf %75, %96 : vector<8x128xf32>
    %98 = vector.broadcast %55 : f32 to vector<8x128xf32>
    %99 = arith.mulf %80, %98 : vector<8x128xf32>
    %100 = arith.addf %97, %99 : vector<8x128xf32>
    %101 = vector.broadcast %56 : f32 to vector<8x128xf32>
    %102 = arith.mulf %85, %101 : vector<8x128xf32>
    %103 = vector.broadcast %67 : f32 to vector<8x128xf32>
    %104 = arith.addf %102, %103 : vector<8x128xf32>
    %105 = arith.addf %100, %104 : vector<8x128xf32>
    %106 = vector.broadcast %60 : f32 to vector<8x128xf32>
    %107 = arith.mulf %75, %106 : vector<8x128xf32>
    %108 = vector.broadcast %61 : f32 to vector<8x128xf32>
    %109 = arith.mulf %80, %108 : vector<8x128xf32>
    %110 = arith.addf %107, %109 : vector<8x128xf32>
    %111 = vector.broadcast %62 : f32 to vector<8x128xf32>
    %112 = arith.mulf %85, %111 : vector<8x128xf32>
    %113 = vector.broadcast %68 : f32 to vector<8x128xf32>
    %114 = arith.addf %112, %113 : vector<8x128xf32>
    %115 = arith.addf %110, %114 : vector<8x128xf32>
    %c3_123 = arith.constant 3 : index
    %116 = arith.index_cast %70 : i32 to index
    %c0_124 = arith.constant 0 : index
    %117 = vector.load %arg2[%c3_123, %116, %c0_124] : memref<18x8x128xf32, #tpu.memory_space<vmem>>, vector<1x8x128xf32>
    %118 = vector.shape_cast %117 : vector<1x8x128xf32> to vector<8x128xf32>
    %119 = vector.broadcast %0 : f32 to vector<8x128xf32>
    %120 = arith.mulf %118, %119 : vector<8x128xf32>
    %121 = vector.broadcast %15 : f32 to vector<8x128xf32>
    %122 = arith.mulf %118, %121 : vector<8x128xf32>
    %123 = vector.broadcast %30 : f32 to vector<8x128xf32>
    %124 = arith.mulf %118, %123 : vector<8x128xf32>
    %c4_125 = arith.constant 4 : index
    %125 = arith.index_cast %70 : i32 to index
    %c0_126 = arith.constant 0 : index
    %126 = vector.load %arg2[%c4_125, %125, %c0_126] : memref<18x8x128xf32, #tpu.memory_space<vmem>>, vector<1x8x128xf32>
    %127 = vector.shape_cast %126 : vector<1x8x128xf32> to vector<8x128xf32>
    %128 = vector.broadcast %1 : f32 to vector<8x128xf32>
    %129 = arith.mulf %127, %128 : vector<8x128xf32>
    %130 = vector.broadcast %16 : f32 to vector<8x128xf32>
    %131 = arith.mulf %127, %130 : vector<8x128xf32>
    %132 = vector.broadcast %31 : f32 to vector<8x128xf32>
    %133 = arith.mulf %127, %132 : vector<8x128xf32>
    %c5_127 = arith.constant 5 : index
    %134 = arith.index_cast %70 : i32 to index
    %c0_128 = arith.constant 0 : index
    %135 = vector.load %arg2[%c5_127, %134, %c0_128] : memref<18x8x128xf32, #tpu.memory_space<vmem>>, vector<1x8x128xf32>
    %136 = vector.shape_cast %135 : vector<1x8x128xf32> to vector<8x128xf32>
    %137 = vector.broadcast %2 : f32 to vector<8x128xf32>
    %138 = arith.mulf %136, %137 : vector<8x128xf32>
    %139 = arith.addf %120, %138 : vector<8x128xf32>
    %140 = vector.broadcast %17 : f32 to vector<8x128xf32>
    %141 = arith.mulf %136, %140 : vector<8x128xf32>
    %142 = arith.addf %122, %141 : vector<8x128xf32>
    %143 = vector.broadcast %32 : f32 to vector<8x128xf32>
    %144 = arith.mulf %136, %143 : vector<8x128xf32>
    %145 = arith.addf %124, %144 : vector<8x128xf32>
    %c6_129 = arith.constant 6 : index
    %146 = arith.index_cast %70 : i32 to index
    %c0_130 = arith.constant 0 : index
    %147 = vector.load %arg2[%c6_129, %146, %c0_130] : memref<18x8x128xf32, #tpu.memory_space<vmem>>, vector<1x8x128xf32>
    %148 = vector.shape_cast %147 : vector<1x8x128xf32> to vector<8x128xf32>
    %149 = vector.broadcast %3 : f32 to vector<8x128xf32>
    %150 = arith.mulf %148, %149 : vector<8x128xf32>
    %151 = arith.addf %129, %150 : vector<8x128xf32>
    %152 = vector.broadcast %18 : f32 to vector<8x128xf32>
    %153 = arith.mulf %148, %152 : vector<8x128xf32>
    %154 = arith.addf %131, %153 : vector<8x128xf32>
    %155 = vector.broadcast %33 : f32 to vector<8x128xf32>
    %156 = arith.mulf %148, %155 : vector<8x128xf32>
    %157 = arith.addf %133, %156 : vector<8x128xf32>
    %c7_131 = arith.constant 7 : index
    %158 = arith.index_cast %70 : i32 to index
    %c0_132 = arith.constant 0 : index
    %159 = vector.load %arg2[%c7_131, %158, %c0_132] : memref<18x8x128xf32, #tpu.memory_space<vmem>>, vector<1x8x128xf32>
    %160 = vector.shape_cast %159 : vector<1x8x128xf32> to vector<8x128xf32>
    %161 = vector.broadcast %4 : f32 to vector<8x128xf32>
    %162 = arith.mulf %160, %161 : vector<8x128xf32>
    %163 = arith.addf %139, %162 : vector<8x128xf32>
    %164 = vector.broadcast %19 : f32 to vector<8x128xf32>
    %165 = arith.mulf %160, %164 : vector<8x128xf32>
    %166 = arith.addf %142, %165 : vector<8x128xf32>
    %167 = vector.broadcast %34 : f32 to vector<8x128xf32>
    %168 = arith.mulf %160, %167 : vector<8x128xf32>
    %169 = arith.addf %145, %168 : vector<8x128xf32>
    %c8_133 = arith.constant 8 : index
    %170 = arith.index_cast %70 : i32 to index
    %c0_134 = arith.constant 0 : index
    %171 = vector.load %arg2[%c8_133, %170, %c0_134] : memref<18x8x128xf32, #tpu.memory_space<vmem>>, vector<1x8x128xf32>
    %172 = vector.shape_cast %171 : vector<1x8x128xf32> to vector<8x128xf32>
    %173 = vector.broadcast %5 : f32 to vector<8x128xf32>
    %174 = arith.mulf %172, %173 : vector<8x128xf32>
    %175 = arith.addf %151, %174 : vector<8x128xf32>
    %176 = vector.broadcast %20 : f32 to vector<8x128xf32>
    %177 = arith.mulf %172, %176 : vector<8x128xf32>
    %178 = arith.addf %154, %177 : vector<8x128xf32>
    %179 = vector.broadcast %35 : f32 to vector<8x128xf32>
    %180 = arith.mulf %172, %179 : vector<8x128xf32>
    %181 = arith.addf %157, %180 : vector<8x128xf32>
    %c9_135 = arith.constant 9 : index
    %182 = arith.index_cast %70 : i32 to index
    %c0_136 = arith.constant 0 : index
    %183 = vector.load %arg2[%c9_135, %182, %c0_136] : memref<18x8x128xf32, #tpu.memory_space<vmem>>, vector<1x8x128xf32>
    %184 = vector.shape_cast %183 : vector<1x8x128xf32> to vector<8x128xf32>
    %185 = vector.broadcast %6 : f32 to vector<8x128xf32>
    %186 = arith.mulf %184, %185 : vector<8x128xf32>
    %187 = arith.addf %163, %186 : vector<8x128xf32>
    %188 = vector.broadcast %21 : f32 to vector<8x128xf32>
    %189 = arith.mulf %184, %188 : vector<8x128xf32>
    %190 = arith.addf %166, %189 : vector<8x128xf32>
    %191 = vector.broadcast %36 : f32 to vector<8x128xf32>
    %192 = arith.mulf %184, %191 : vector<8x128xf32>
    %193 = arith.addf %169, %192 : vector<8x128xf32>
    %c10_137 = arith.constant 10 : index
    %194 = arith.index_cast %70 : i32 to index
    %c0_138 = arith.constant 0 : index
    %195 = vector.load %arg2[%c10_137, %194, %c0_138] : memref<18x8x128xf32, #tpu.memory_space<vmem>>, vector<1x8x128xf32>
    %196 = vector.shape_cast %195 : vector<1x8x128xf32> to vector<8x128xf32>
    %197 = vector.broadcast %7 : f32 to vector<8x128xf32>
    %198 = arith.mulf %196, %197 : vector<8x128xf32>
    %199 = arith.addf %175, %198 : vector<8x128xf32>
    %200 = vector.broadcast %22 : f32 to vector<8x128xf32>
    %201 = arith.mulf %196, %200 : vector<8x128xf32>
    %202 = arith.addf %178, %201 : vector<8x128xf32>
    %203 = vector.broadcast %37 : f32 to vector<8x128xf32>
    %204 = arith.mulf %196, %203 : vector<8x128xf32>
    %205 = arith.addf %181, %204 : vector<8x128xf32>
    %c11_139 = arith.constant 11 : index
    %206 = arith.index_cast %70 : i32 to index
    %c0_140 = arith.constant 0 : index
    %207 = vector.load %arg2[%c11_139, %206, %c0_140] : memref<18x8x128xf32, #tpu.memory_space<vmem>>, vector<1x8x128xf32>
    %208 = vector.shape_cast %207 : vector<1x8x128xf32> to vector<8x128xf32>
    %209 = vector.broadcast %8 : f32 to vector<8x128xf32>
    %210 = arith.mulf %208, %209 : vector<8x128xf32>
    %211 = arith.addf %187, %210 : vector<8x128xf32>
    %212 = vector.broadcast %23 : f32 to vector<8x128xf32>
    %213 = arith.mulf %208, %212 : vector<8x128xf32>
    %214 = arith.addf %190, %213 : vector<8x128xf32>
    %215 = vector.broadcast %38 : f32 to vector<8x128xf32>
    %216 = arith.mulf %208, %215 : vector<8x128xf32>
    %217 = arith.addf %193, %216 : vector<8x128xf32>
    %c12_141 = arith.constant 12 : index
    %218 = arith.index_cast %70 : i32 to index
    %c0_142 = arith.constant 0 : index
    %219 = vector.load %arg2[%c12_141, %218, %c0_142] : memref<18x8x128xf32, #tpu.memory_space<vmem>>, vector<1x8x128xf32>
    %220 = vector.shape_cast %219 : vector<1x8x128xf32> to vector<8x128xf32>
    %221 = vector.broadcast %9 : f32 to vector<8x128xf32>
    %222 = arith.mulf %220, %221 : vector<8x128xf32>
    %223 = arith.addf %199, %222 : vector<8x128xf32>
    %224 = vector.broadcast %24 : f32 to vector<8x128xf32>
    %225 = arith.mulf %220, %224 : vector<8x128xf32>
    %226 = arith.addf %202, %225 : vector<8x128xf32>
    %227 = vector.broadcast %39 : f32 to vector<8x128xf32>
    %228 = arith.mulf %220, %227 : vector<8x128xf32>
    %229 = arith.addf %205, %228 : vector<8x128xf32>
    %c13_143 = arith.constant 13 : index
    %230 = arith.index_cast %70 : i32 to index
    %c0_144 = arith.constant 0 : index
    %231 = vector.load %arg2[%c13_143, %230, %c0_144] : memref<18x8x128xf32, #tpu.memory_space<vmem>>, vector<1x8x128xf32>
    %232 = vector.shape_cast %231 : vector<1x8x128xf32> to vector<8x128xf32>
    %233 = vector.broadcast %10 : f32 to vector<8x128xf32>
    %234 = arith.mulf %232, %233 : vector<8x128xf32>
    %235 = arith.addf %211, %234 : vector<8x128xf32>
    %236 = vector.broadcast %25 : f32 to vector<8x128xf32>
    %237 = arith.mulf %232, %236 : vector<8x128xf32>
    %238 = arith.addf %214, %237 : vector<8x128xf32>
    %239 = vector.broadcast %40 : f32 to vector<8x128xf32>
    %240 = arith.mulf %232, %239 : vector<8x128xf32>
    %241 = arith.addf %217, %240 : vector<8x128xf32>
    %c14_145 = arith.constant 14 : index
    %242 = arith.index_cast %70 : i32 to index
    %c0_146 = arith.constant 0 : index
    %243 = vector.load %arg2[%c14_145, %242, %c0_146] : memref<18x8x128xf32, #tpu.memory_space<vmem>>, vector<1x8x128xf32>
    %244 = vector.shape_cast %243 : vector<1x8x128xf32> to vector<8x128xf32>
    %245 = vector.broadcast %11 : f32 to vector<8x128xf32>
    %246 = arith.mulf %244, %245 : vector<8x128xf32>
    %247 = arith.addf %223, %246 : vector<8x128xf32>
    %248 = vector.broadcast %26 : f32 to vector<8x128xf32>
    %249 = arith.mulf %244, %248 : vector<8x128xf32>
    %250 = arith.addf %226, %249 : vector<8x128xf32>
    %251 = vector.broadcast %41 : f32 to vector<8x128xf32>
    %252 = arith.mulf %244, %251 : vector<8x128xf32>
    %253 = arith.addf %229, %252 : vector<8x128xf32>
    %c15_147 = arith.constant 15 : index
    %254 = arith.index_cast %70 : i32 to index
    %c0_148 = arith.constant 0 : index
    %255 = vector.load %arg2[%c15_147, %254, %c0_148] : memref<18x8x128xf32, #tpu.memory_space<vmem>>, vector<1x8x128xf32>
    %256 = vector.shape_cast %255 : vector<1x8x128xf32> to vector<8x128xf32>
    %257 = vector.broadcast %12 : f32 to vector<8x128xf32>
    %258 = arith.mulf %256, %257 : vector<8x128xf32>
    %259 = arith.addf %235, %258 : vector<8x128xf32>
    %260 = vector.broadcast %27 : f32 to vector<8x128xf32>
    %261 = arith.mulf %256, %260 : vector<8x128xf32>
    %262 = arith.addf %238, %261 : vector<8x128xf32>
    %263 = vector.broadcast %42 : f32 to vector<8x128xf32>
    %264 = arith.mulf %256, %263 : vector<8x128xf32>
    %265 = arith.addf %241, %264 : vector<8x128xf32>
    %c16_149 = arith.constant 16 : index
    %266 = arith.index_cast %70 : i32 to index
    %c0_150 = arith.constant 0 : index
    %267 = vector.load %arg2[%c16_149, %266, %c0_150] : memref<18x8x128xf32, #tpu.memory_space<vmem>>, vector<1x8x128xf32>
    %268 = vector.shape_cast %267 : vector<1x8x128xf32> to vector<8x128xf32>
    %269 = vector.broadcast %13 : f32 to vector<8x128xf32>
    %270 = arith.mulf %268, %269 : vector<8x128xf32>
    %271 = arith.addf %247, %270 : vector<8x128xf32>
    %272 = vector.broadcast %28 : f32 to vector<8x128xf32>
    %273 = arith.mulf %268, %272 : vector<8x128xf32>
    %274 = arith.addf %250, %273 : vector<8x128xf32>
    %275 = vector.broadcast %43 : f32 to vector<8x128xf32>
    %276 = arith.mulf %268, %275 : vector<8x128xf32>
    %277 = arith.addf %253, %276 : vector<8x128xf32>
    %c17_151 = arith.constant 17 : index
    %278 = arith.index_cast %70 : i32 to index
    %c0_152 = arith.constant 0 : index
    %279 = vector.load %arg2[%c17_151, %278, %c0_152] : memref<18x8x128xf32, #tpu.memory_space<vmem>>, vector<1x8x128xf32>
    %280 = vector.shape_cast %279 : vector<1x8x128xf32> to vector<8x128xf32>
    %281 = vector.broadcast %14 : f32 to vector<8x128xf32>
    %282 = arith.mulf %280, %281 : vector<8x128xf32>
    %283 = arith.addf %259, %282 : vector<8x128xf32>
    %284 = vector.broadcast %29 : f32 to vector<8x128xf32>
    %285 = arith.mulf %280, %284 : vector<8x128xf32>
    %286 = arith.addf %262, %285 : vector<8x128xf32>
    %287 = vector.broadcast %44 : f32 to vector<8x128xf32>
    %288 = arith.mulf %280, %287 : vector<8x128xf32>
    %289 = arith.addf %265, %288 : vector<8x128xf32>
    %290 = arith.addf %283, %271 : vector<8x128xf32>
    %291 = vector.broadcast %45 : f32 to vector<8x128xf32>
    %292 = arith.addf %290, %291 : vector<8x128xf32>
    %cst_153 = arith.constant 0.000000e+00 : f32
    %293 = vector.broadcast %cst_153 : f32 to vector<8x128xf32>
    %294 = arith.maximumf %292, %293 : vector<8x128xf32>
    %295 = arith.addf %286, %274 : vector<8x128xf32>
    %296 = vector.broadcast %46 : f32 to vector<8x128xf32>
    %297 = arith.addf %295, %296 : vector<8x128xf32>
    %cst_154 = arith.constant 0.000000e+00 : f32
    %298 = vector.broadcast %cst_154 : f32 to vector<8x128xf32>
    %299 = arith.maximumf %297, %298 : vector<8x128xf32>
    %300 = arith.addf %289, %277 : vector<8x128xf32>
    %301 = vector.broadcast %47 : f32 to vector<8x128xf32>
    %302 = arith.addf %300, %301 : vector<8x128xf32>
    %cst_155 = arith.constant 0.000000e+00 : f32
    %303 = vector.broadcast %cst_155 : f32 to vector<8x128xf32>
    %304 = arith.maximumf %302, %303 : vector<8x128xf32>
    %305 = vector.broadcast %51 : f32 to vector<8x128xf32>
    %306 = arith.mulf %294, %305 : vector<8x128xf32>
    %307 = vector.broadcast %52 : f32 to vector<8x128xf32>
    %308 = arith.mulf %299, %307 : vector<8x128xf32>
    %309 = arith.addf %306, %308 : vector<8x128xf32>
    %310 = vector.broadcast %53 : f32 to vector<8x128xf32>
    %311 = arith.mulf %304, %310 : vector<8x128xf32>
    %312 = arith.addf %309, %311 : vector<8x128xf32>
    %313 = arith.addf %95, %312 : vector<8x128xf32>
    %c0_156 = arith.constant 0 : index
    %314 = arith.index_cast %70 : i32 to index
    %c0_157 = arith.constant 0 : index
    %315 = vector.load %arg3[%c0_156, %314, %c0_157] : memref<3x8x128xf32, #tpu.memory_space<vmem>>, vector<1x8x128xf32>
    %316 = vector.shape_cast %315 : vector<1x8x128xf32> to vector<8x128xf32>
    %317 = vector.shape_cast %313 : vector<8x128xf32> to vector<1x8x128xf32>
    tpu.vector_store %arg3[%c0_156, %314, %c0_157], %317 {strides = array<i32>} : memref<3x8x128xf32, #tpu.memory_space<vmem>>, vector<1x8x128xf32>,
    %318 = vector.broadcast %57 : f32 to vector<8x128xf32>
    %319 = arith.mulf %294, %318 : vector<8x128xf32>
    %320 = vector.broadcast %58 : f32 to vector<8x128xf32>
    %321 = arith.mulf %299, %320 : vector<8x128xf32>
    %322 = arith.addf %319, %321 : vector<8x128xf32>
    %323 = vector.broadcast %59 : f32 to vector<8x128xf32>
    %324 = arith.mulf %304, %323 : vector<8x128xf32>
    %325 = arith.addf %322, %324 : vector<8x128xf32>
    %326 = arith.addf %105, %325 : vector<8x128xf32>
    %c1_158 = arith.constant 1 : index
    %327 = arith.index_cast %70 : i32 to index
    %c0_159 = arith.constant 0 : index
    %328 = vector.load %arg3[%c1_158, %327, %c0_159] : memref<3x8x128xf32, #tpu.memory_space<vmem>>, vector<1x8x128xf32>
    %329 = vector.shape_cast %328 : vector<1x8x128xf32> to vector<8x128xf32>
    %330 = vector.shape_cast %326 : vector<8x128xf32> to vector<1x8x128xf32>
    tpu.vector_store %arg3[%c1_158, %327, %c0_159], %330 {strides = array<i32>} : memref<3x8x128xf32, #tpu.memory_space<vmem>>, vector<1x8x128xf32>,
    %331 = vector.broadcast %63 : f32 to vector<8x128xf32>
    %332 = arith.mulf %294, %331 : vector<8x128xf32>
    %333 = vector.broadcast %64 : f32 to vector<8x128xf32>
    %334 = arith.mulf %299, %333 : vector<8x128xf32>
    %335 = arith.addf %332, %334 : vector<8x128xf32>
    %336 = vector.broadcast %65 : f32 to vector<8x128xf32>
    %337 = arith.mulf %304, %336 : vector<8x128xf32>
    %338 = arith.addf %335, %337 : vector<8x128xf32>
    %339 = arith.addf %115, %338 : vector<8x128xf32>
    %c2_160 = arith.constant 2 : index
    %340 = arith.index_cast %70 : i32 to index
    %c0_161 = arith.constant 0 : index
    %341 = vector.load %arg3[%c2_160, %340, %c0_161] : memref<3x8x128xf32, #tpu.memory_space<vmem>>, vector<1x8x128xf32>
    %342 = vector.shape_cast %341 : vector<1x8x128xf32> to vector<8x128xf32>
    %343 = vector.shape_cast %339 : vector<8x128xf32> to vector<1x8x128xf32>
    tpu.vector_store %arg3[%c2_160, %340, %c0_161], %343 {strides = array<i32>} : memref<3x8x128xf32, #tpu.memory_space<vmem>>, vector<1x8x128xf32>,
    %c1_i32 = arith.constant 1 : i32
    return
  }
  func.func @transform_0(%arg0: i32) -> (i32, i32) {
    %c0_i32 = arith.constant 0 : i32
    %c0_i32_0 = arith.constant 0 : i32
    %c0_i32_1 = arith.constant 0 : i32
    return %c0_i32, %c0_i32_0 : i32, i32
  }
  func.func @transform_1(%arg0: i32) -> (i32, i32, i32) {
    %c0_i32 = arith.constant 0 : i32
    %c0_i32_0 = arith.constant 0 : i32
    %c0_i32_1 = arith.constant 0 : i32
    return %c0_i32, %arg0, %c0_i32_0 : i32, i32, i32
  }
  func.func @transform_2(%arg0: i32) -> (i32, i32, i32) {
    %c0_i32 = arith.constant 0 : i32
    %c0_i32_0 = arith.constant 0 : i32
    %c0_i32_1 = arith.constant 0 : i32
    return %c0_i32, %arg0, %c0_i32_0 : i32, i32, i32
  }
}

</mosaic_0001>

<llo_original>
// kernel: tpu_custom_call.1
$region0: #{tpu_custom_call.1}
  #allocation0 [shape = 'u32[]', space=smem, size = 0x4, offset = 0x4, fixed_abs, tag = 'smem constant byte address 0x4 - core index']
  #allocation1 [shape = 'u32[144,128]{1,0:T(1,128)}', space=vmem, size = 0x12000, scoped, tag = 'internal scratch']
  %s0 = inlined_call_operand.hbm [shape: f32[3,23], index: 0, kind: input, shape index: {}]
  %s1 = inlined_call_operand.hbm [shape: f32[18,24,128], index: 1, kind: input, shape index: {}]
  %s2 = inlined_call_operand.hbm [shape: f32[3,24,128], index: 2, kind: output, shape index: {}]
  %s3 = sld [smem:[#allocation0]]
  $region49: #{tpu_custom_call.1} parent=0
    _
  %s5 = ssub.s32 1, %s3
  %s6 = scalar_select 0, %s5, %s3
  $region1: #{tpu_custom_call.1} parent=0
    #allocation2 [shape = 'u8[2048]{0}', space=smem, size = 0x800, scoped, tag = 'input window, operand 0, single buffered']
    #allocation3 [shape = 's32[2]{0}', space=sflag, size = 0x8, scoped, tag = 'scoped memory for tpu_custom_call.1']
    #allocation4 [shape = 's32[2]{0}', space=sflag, size = 0x8, scoped, tag = 'scoped memory for tpu_custom_call.1']
    #allocation5 [shape = 's32[2]{0}', space=sflag, size = 0x8, scoped, tag = 'scoped memory for tpu_custom_call.1']
    #allocation6 [shape = 'u8[147456]{0}', space=vmem, size = 0x24000, scoped, tag = 'input window, operand 1']
    #allocation7 [shape = 'u8[24576]{0}', space=vmem, size = 0x6000, scoped, tag = 'output window, operand 0']
    %7 = vsyncpa [#allocation5], 0
    %8 = vsyncpa [#allocation3], 0
    %s9 = scalar_lea.sflag [#allocation3], 1
    %10 = vsyncpa %s9, 0
    %11 = vsyncpa [#allocation4], 0
    %s12 = scalar_lea.sflag [#allocation4], 1
    %13 = vsyncpa %s12, 0
    loop: start=0, step=1, limit=5
    $region2: #{tpu_custom_call.1} parent=1 // loop_pre_header
      _
    $region3: #{tpu_custom_call.1} parent=1 // loop_header
      %s15 = sphi 0, %s19
      %p16 = scmp.ge.s32.totalorder %s15, 5
      %s23 = sphi 0, %s23
      %s25 = sphi 0, %s23
      %s26 = sphi 0, %s25
      %s40 = sphi 0, %s26
      %s46 = sphi 0, %s48
      %s49 = sphi 0, %s46
      %s50 = sphi 0, %s49
      %s66 = sphi 0, %s50
      %s72 = sphi 0, %s74
      %s75 = sphi 0, %s72
      %s76 = sphi 0, %s75
      %s92 = sphi 0, %s76
    $region4: #{tpu_custom_call.1} parent=1 // loop_header_branch
      %18 = sbr.rel (%p16) target = $region8
    $region5: #{tpu_custom_call.1} parent=1 // loop_body
      %s20 = ssub.s32 %s15, 1
      %s21 = ssub.s32 %s15, 2
      %s22 = sadd.s32 %s15, 1
      %s24 = sadd.s32 %s23, 1
      %p27 = scmp.eq.s32.totalorder %s15, 2
      %p28 = scmp.ne.s32.totalorder %s23, %s25
      %p29 = scmp.eq.s32.totalorder %s15, 0
      %p30 = por %p28, %p29
      %p31 = scmp.ne.s32.totalorder %s23, %s25
      %p32 = scmp.eq.s32.totalorder %s20, 2
      %p33 = por %p31, %p32
      %p34 = scmp.ne.s32.totalorder %s25, %s26
      %p35 = scmp.eq.s32.totalorder %s20, 0
      %p36 = por %p34, %p35
      %p37 = scmp.ne.s32.totalorder %s25, %s26
      %p38 = scmp.eq.s32.totalorder %s21, 2
      %p39 = por %p37, %p38
      %p41 = scmp.ne.s32.totalorder %s26, %s40
      %p42 = scmp.eq.s32.totalorder %s21, 0
      %p43 = por %p41, %p42
      %s44 = ssub.s32 %s15, %s22
      %p45 = scmp.eq.s32.totalorder %s44, 0
      %s47 = sadd.s32 %s46, 1
      %s48 = scalar_select %p45, %s46, %s47
      %p51 = pneg %p45
      %p52 = scmp.eq.s32.totalorder %s15, 2
      %p53 = por %p51, %p52
      %p54 = scmp.ne.s32.totalorder %s46, %s49
      %p55 = scmp.eq.s32.totalorder %s15, 0
      %p56 = por %p54, %p55
      %p57 = scmp.ne.s32.totalorder %s46, %s49
      %p58 = scmp.eq.s32.totalorder %s20, 2
      %p59 = por %p57, %p58
      %p60 = scmp.ne.s32.totalorder %s49, %s50
      %p61 = scmp.eq.s32.totalorder %s20, 0
      %p62 = por %p60, %p61
      %p63 = scmp.ne.s32.totalorder %s49, %s50
      %p64 = scmp.eq.s32.totalorder %s21, 2
      %p65 = por %p63, %p64
      %p67 = scmp.ne.s32.totalorder %s50, %s66
      %p68 = scmp.eq.s32.totalorder %s21, 0
      %p69 = por %p67, %p68
      %s70 = ssub.s32 %s15, %s22
      %p71 = scmp.eq.s32.totalorder %s70, 0
      %s73 = sadd.s32 %s72, 1
      %s74 = scalar_select %p71, %s72, %s73
      %p77 = pneg %p71
      %p78 = scmp.eq.s32.totalorder %s15, 2
      %p79 = por %p77, %p78
      %p80 = scmp.ne.s32.totalorder %s72, %s75
      %p81 = scmp.eq.s32.totalorder %s15, 0
      %p82 = por %p80, %p81
      %p83 = scmp.ne.s32.totalorder %s72, %s75
      %p84 = scmp.eq.s32.totalorder %s20, 2
      %p85 = por %p83, %p84
      %p86 = scmp.ne.s32.totalorder %s75, %s76
      %p87 = scmp.eq.s32.totalorder %s20, 0
      %p88 = por %p86, %p87
      %p89 = scmp.ne.s32.totalorder %s75, %s76
      %p90 = scmp.eq.s32.totalorder %s21, 2
      %p91 = por %p89, %p90
      %p93 = scmp.ne.s32.totalorder %s76, %s92
      %p94 = scmp.eq.s32.totalorder %s21, 0
      %p95 = por %p93, %p94
      %p96 = scmp.le.s32.totalorder 1, %s15
      %p97 = scmp.lt.s32.totalorder %s15, 4
      %p98 = pnand %p96, %p97
      %p99 = pneg %p98
      // Predicated region
      $region9: #{tpu_custom_call.1} parent=5 // pred_check
        _
      $region10: #{tpu_custom_call.1} parent=5 // pred_check_branch
        %101 = sbr.rel (%p98) target = $region12
      $region11: #{tpu_custom_call.1} parent=5 // pred_region
        %s102 = ssub.s32 %s15, 1
        // Predicated region
        $region13: #{tpu_custom_call.1} parent=11 // pred_check
          %p103 = pneg %p36
        $region14: #{tpu_custom_call.1} parent=11 // pred_check_branch
          %105 = sbr.rel (%p103) target = $region16
        $region15: #{tpu_custom_call.1} parent=11 // pred_region
          %s107 = ssub.s32 64, 64
          %108 = vsyncadd [#allocation5], %s107
          %111 = dma.hbm_to_smem %s0, 64, [#allocation2], [#allocation5]
        $region16: #{tpu_custom_call.1} parent=11 // pred_fallthru
          _
      $region12: #{tpu_custom_call.1} parent=5 // pred_fallthru
        _
      %p112 = scmp.lt.s32.totalorder %s15, 3
      // Predicated region
      $region17: #{tpu_custom_call.1} parent=5 // pred_check
        %p113 = pneg %p112
      $region18: #{tpu_custom_call.1} parent=5 // pred_check_branch
        %115 = sbr.rel (%p113) target = $region20
      $region19: #{tpu_custom_call.1} parent=5 // pred_region
        // Predicated region
        $region21: #{tpu_custom_call.1} parent=19 // pred_check
          %p116 = pneg %p56
        $region22: #{tpu_custom_call.1} parent=19 // pred_check_branch
          %118 = sbr.rel (%p116) target = $region24
        $region23: #{tpu_custom_call.1} parent=19 // pred_region
          %s119 = sand.u32 %s46, 1
          %s120 = scalar_lea.sflag [#allocation3], %s119
          %s121 = sand.u32 %s46, 1
          %s122 = smul.addr %s121, 144
          %s123 = scalar_lea.vmem [#allocation6], %s122
          %s125 = ssub.s32 2304, 2304
          %126 = vsyncadd %s120, %s125
          %s127 = smul.addr %s15, 128
          %s128 = scalar_lea.hbm %s1, %s127
          %s129 = sshll.u32 %s123, 4
          %s130 = int_to_ptr.vmem [resolvable:$true] %s129
          %135 = dma.hbm_to_vmem [thread:$0]  %s128, 2304, %s130, %s120, 384, 128, 8
        $region24: #{tpu_custom_call.1} parent=19 // pred_fallthru
          _
      $region20: #{tpu_custom_call.1} parent=5 // pred_fallthru
        _
      %p136 = scmp.le.s32.totalorder 1, %s15
      %p137 = scmp.lt.s32.totalorder %s15, 4
      %p138 = pnand %p136, %p137
      %p139 = pneg %p138
      // Predicated region
      $region25: #{tpu_custom_call.1} parent=5 // pred_check
        _
      $region26: #{tpu_custom_call.1} parent=5 // pred_check_branch
        %141 = sbr.rel (%p138) target = $region28
      $region27: #{tpu_custom_call.1} parent=5 // pred_region
        %s142 = ssub.s32 %s15, 1
        // Predicated region
        $region29: #{tpu_custom_call.1} parent=27 // pred_check
          %p143 = pneg %p36
        $region30: #{tpu_custom_call.1} parent=27 // pred_check_branch
          %145 = sbr.rel (%p143) target = $region32
        $region31: #{tpu_custom_call.1} parent=27 // pred_region
          %146 = dma.done [#allocation5], 64
        $region32: #{tpu_custom_call.1} parent=27 // pred_fallthru
          _
        %s147 = sand.u32 %s49, 1
        %s148 = scalar_lea.sflag [#allocation3], %s147
        %s149 = sand.u32 %s49, 1
        %s150 = smul.addr %s149, 144
        %s151 = scalar_lea.vmem [#allocation6], %s150
        // Predicated region
        $region33: #{tpu_custom_call.1} parent=27 // pred_check
          %p152 = pneg %p62
        $region34: #{tpu_custom_call.1} parent=27 // pred_check_branch
          %154 = sbr.rel (%p152) target = $region36
        $region35: #{tpu_custom_call.1} parent=27 // pred_region
          %155 = dma.done %s148, 2304
        $region36: #{tpu_custom_call.1} parent=27 // pred_fallthru
          _
        %156 = sfence
        %p157 = pneg %p36
        %p158 = pneg %p33
        %s159 = sand.u32 %s49, 1
        %s160 = scalar_lea.sflag [#allocation3], %s159
        %s161 = sand.u32 %s49, 1
        %s162 = smul.addr %s161, 144
        %s163 = scalar_lea.vmem [#allocation6], %s162
        %p164 = pneg %p62
        %p165 = pneg %p59
        %p166 = pneg %p88
        %p167 = pneg %p85
        %s168 = sand.u32 %s75, 1
        %s169 = scalar_lea.sflag [#allocation4], %s168
        %s170 = sand.u32 %s75, 1
        %s171 = smul.addr %s170, 24
        %s172 = scalar_lea.vmem [#allocation7], %s171
        %s173 = sld [smem:[#allocation2]]
        %s174 = sld [smem:[#allocation2 + $0x1]]
        %s175 = sld [smem:[#allocation2 + $0x2]]
        %s176 = sld [smem:[#allocation2 + $0x3]]
        %s177 = sld [smem:[#allocation2 + $0x4]]
        %s178 = sld [smem:[#allocation2 + $0x5]]
        %s179 = sld [smem:[#allocation2 + $0x6]]
        %s180 = sld [smem:[#allocation2 + $0x7]]
        %s181 = sld [smem:[#allocation2 + $0x8]]
        %s182 = sld [smem:[#allocation2 + $0x9]]
        %s183 = sld [smem:[#allocation2 + $0xa]]
        %s184 = sld [smem:[#allocation2 + $0xb]]
        %s185 = sld [smem:[#allocation2 + $0xc]]
        %s186 = sld [smem:[#allocation2 + $0xd]]
        %s187 = sld [smem:[#allocation2 + $0xe]]
        %s188 = sld [smem:[#allocation2 + $0x80]]
        %s189 = sld [smem:[#allocation2 + $0x81]]
        %s190 = sld [smem:[#allocation2 + $0x82]]
        %s191 = sld [smem:[#allocation2 + $0x83]]
        %s192 = sld [smem:[#allocation2 + $0x84]]
        %s193 = sld [smem:[#allocation2 + $0x85]]
        %s194 = sld [smem:[#allocation2 + $0x86]]
        %s195 = sld [smem:[#allocation2 + $0x87]]
        %s196 = sld [smem:[#allocation2 + $0x88]]
        %s197 = sld [smem:[#allocation2 + $0x89]]
        %s198 = sld [smem:[#allocation2 + $0x8a]]
        %s199 = sld [smem:[#allocation2 + $0x8b]]
        %s200 = sld [smem:[#allocation2 + $0x8c]]
        %s201 = sld [smem:[#allocation2 + $0x8d]]
        %s202 = sld [smem:[#allocation2 + $0x8e]]
        %s203 = sld [smem:[#allocation2 + $0x100]]
        %s204 = sld [smem:[#allocation2 + $0x101]]
        %s205 = sld [smem:[#allocation2 + $0x102]]
        %s206 = sld [smem:[#allocation2 + $0x103]]
        %s207 = sld [smem:[#allocation2 + $0x104]]
        %s208 = sld [smem:[#allocation2 + $0x105]]
        %s209 = sld [smem:[#allocation2 + $0x106]]
        %s210 = sld [smem:[#allocation2 + $0x107]]
        %s211 = sld [smem:[#allocation2 + $0x108]]
        %s212 = sld [smem:[#allocation2 + $0x109]]
        %s213 = sld [smem:[#allocation2 + $0x10a]]
        %s214 = sld [smem:[#allocation2 + $0x10b]]
        %s215 = sld [smem:[#allocation2 + $0x10c]]
        %s216 = sld [smem:[#allocation2 + $0x10d]]
        %s217 = sld [smem:[#allocation2 + $0x10e]]
        %s218 = sld [smem:[#allocation2 + $0xf]]
        %s219 = sld [smem:[#allocation2 + $0x8f]]
        %s220 = sld [smem:[#allocation2 + $0x10f]]
        %s221 = sld [smem:[#allocation2 + $0x10]]
        %s222 = sld [smem:[#allocation2 + $0x11]]
        %s223 = sld [smem:[#allocation2 + $0x12]]
        %s224 = sld [smem:[#allocation2 + $0x13]]
        %s225 = sld [smem:[#allocation2 + $0x14]]
        %s226 = sld [smem:[#allocation2 + $0x15]]
        %s227 = sld [smem:[#allocation2 + $0x90]]
        %s228 = sld [smem:[#allocation2 + $0x91]]
        %s229 = sld [smem:[#allocation2 + $0x92]]
        %s230 = sld [smem:[#allocation2 + $0x93]]
        %s231 = sld [smem:[#allocation2 + $0x94]]
        %s232 = sld [smem:[#allocation2 + $0x95]]
        %s233 = sld [smem:[#allocation2 + $0x110]]
        %s234 = sld [smem:[#allocation2 + $0x111]]
        %s235 = sld [smem:[#allocation2 + $0x112]]
        %s236 = sld [smem:[#allocation2 + $0x113]]
        %s237 = sld [smem:[#allocation2 + $0x114]]
        %s238 = sld [smem:[#allocation2 + $0x115]]
        %s239 = sld [smem:[#allocation2 + $0x16]]
        %s240 = sld [smem:[#allocation2 + $0x96]]
        %s241 = sld [smem:[#allocation2 + $0x116]]
        %v242 = vld [vmem:[%s151] sm:$0xff]
        %v243 = vmax.f32 %v242, 0.0
        %s244 = sadd.s32 0, 8
        %s245 = scalar_lea.vmem %s151, %s244 [#allocation6]
        %v246 = vld [vmem:[%s245] sm:$0xff]
        %v247 = vmax.f32 %v246, 0.0
        %s248 = sadd.s32 0, 16
        %s249 = scalar_lea.vmem %s151, %s248 [#allocation6]
        %v250 = vld [vmem:[%s249] sm:$0xff]
        %v251 = vmax.f32 %v250, 0.0
        %v252 = vstv %s221
        %v253 = vmul.f32 %v243, %v252
        %v254 = vstv %s222
        %v255 = vmul.f32 %v247, %v254
        %v256 = vadd.f32 %v253, %v255
        %v257 = vstv %s223
        %v258 = vmul.f32 %v251, %v257
        %v259 = vstv %s239
        %v260 = vadd.f32 %v258, %v259
        %v261 = vadd.f32 %v256, %v260
        %v262 = vstv %s227
        %v263 = vmul.f32 %v243, %v262
        %v264 = vstv %s228
        %v265 = vmul.f32 %v247, %v264
        %v266 = vadd.f32 %v263, %v265
        %v267 = vstv %s229
        %v268 = vmul.f32 %v251, %v267
        %v269 = vstv %s240
        %v270 = vadd.f32 %v268, %v269
        %v271 = vadd.f32 %v266, %v270
        %v272 = vstv %s233
        %v273 = vmul.f32 %v243, %v272
        %v274 = vstv %s234
        %v275 = vmul.f32 %v247, %v274
        %v276 = vadd.f32 %v273, %v275
        %v277 = vstv %s235
        %v278 = vmul.f32 %v251, %v277
        %v279 = vstv %s241
        %v280 = vadd.f32 %v278, %v279
        %v281 = vadd.f32 %v276, %v280
        %s282 = sadd.s32 0, 24
        %s283 = scalar_lea.vmem %s151, %s282 [#allocation6]
        %v284 = vld [vmem:[%s283] sm:$0xff]
        %v285 = vstv %s173
        %v286 = vmul.f32 %v284, %v285
        %v287 = vstv %s188
        %v288 = vmul.f32 %v284, %v287
        %v289 = vstv %s203
        %v290 = vmul.f32 %v284, %v289
        %s291 = sadd.s32 0, 32
        %s292 = scalar_lea.vmem %s151, %s291 [#allocation6]
        %v293 = vld [vmem:[%s292] sm:$0xff]
        %v294 = vstv %s174
        %v295 = vmul.f32 %v293, %v294
        %v296 = vstv %s189
        %v297 = vmul.f32 %v293, %v296
        %v298 = vstv %s204
        %v299 = vmul.f32 %v293, %v298
        %s300 = sadd.s32 0, 40
        %s301 = scalar_lea.vmem %s151, %s300 [#allocation6]
        %v302 = vld [vmem:[%s301] sm:$0xff]
        %v303 = vstv %s175
        %v304 = vmul.f32 %v302, %v303
        %v305 = vadd.f32 %v286, %v304
        %v306 = vstv %s190
        %v307 = vmul.f32 %v302, %v306
        %v308 = vadd.f32 %v288, %v307
        %v309 = vstv %s205
        %v310 = vmul.f32 %v302, %v309
        %v311 = vadd.f32 %v290, %v310
        %s312 = sadd.s32 0, 48
        %s313 = scalar_lea.vmem %s151, %s312 [#allocation6]
        %v314 = vld [vmem:[%s313] sm:$0xff]
        %v315 = vstv %s176
        %v316 = vmul.f32 %v314, %v315
        %v317 = vadd.f32 %v295, %v316
        %v318 = vstv %s191
        %v319 = vmul.f32 %v314, %v318
        %v320 = vadd.f32 %v297, %v319
        %v321 = vstv %s206
        %v322 = vmul.f32 %v314, %v321
        %v323 = vadd.f32 %v299, %v322
        %s324 = sadd.s32 0, 56
        %s325 = scalar_lea.vmem %s151, %s324 [#allocation6]
        %v326 = vld [vmem:[%s325] sm:$0xff]
        %v327 = vstv %s177
        %v328 = vmul.f32 %v326, %v327
        %v329 = vadd.f32 %v305, %v328
        %v330 = vstv %s192
        %v331 = vmul.f32 %v326, %v330
        %v332 = vadd.f32 %v308, %v331
        %v333 = vstv %s207
        %v334 = vmul.f32 %v326, %v333
        %v335 = vadd.f32 %v311, %v334
        %s336 = sadd.s32 0, 64
        %s337 = scalar_lea.vmem %s151, %s336 [#allocation6]
        %v338 = vld [vmem:[%s337] sm:$0xff]
        %v339 = vstv %s178
        %v340 = vmul.f32 %v338, %v339
        %v341 = vadd.f32 %v317, %v340
        %v342 = vstv %s193
        %v343 = vmul.f32 %v338, %v342
        %v344 = vadd.f32 %v320, %v343
        %v345 = vstv %s208
        %v346 = vmul.f32 %v338, %v345
        %v347 = vadd.f32 %v323, %v346
        %s348 = sadd.s32 0, 72
        %s349 = scalar_lea.vmem %s151, %s348 [#allocation6]
        %v350 = vld [vmem:[%s349] sm:$0xff]
        %v351 = vstv %s179
        %v352 = vmul.f32 %v350, %v351
        %v353 = vadd.f32 %v329, %v352
        %v354 = vstv %s194
        %v355 = vmul.f32 %v350, %v354
        %v356 = vadd.f32 %v332, %v355
        %v357 = vstv %s209
        %v358 = vmul.f32 %v350, %v357
        %v359 = vadd.f32 %v335, %v358
        %s360 = sadd.s32 0, 80
        %s361 = scalar_lea.vmem %s151, %s360 [#allocation6]
        %v362 = vld [vmem:[%s361] sm:$0xff]
        %v363 = vstv %s180
        %v364 = vmul.f32 %v362, %v363
        %v365 = vadd.f32 %v341, %v364
        %v366 = vstv %s195
        %v367 = vmul.f32 %v362, %v366
        %v368 = vadd.f32 %v344, %v367
        %v369 = vstv %s210
        %v370 = vmul.f32 %v362, %v369
        %v371 = vadd.f32 %v347, %v370
        %s372 = sadd.s32 0, 88
        %s373 = scalar_lea.vmem %s151, %s372 [#allocation6]
        %v374 = vld [vmem:[%s373] sm:$0xff]
        %v375 = vstv %s181
        %v376 = vmul.f32 %v374, %v375
        %v377 = vadd.f32 %v353, %v376
        %v378 = vstv %s196
        %v379 = vmul.f32 %v374, %v378
        %v380 = vadd.f32 %v356, %v379
        %v381 = vstv %s211
        %v382 = vmul.f32 %v374, %v381
        %v383 = vadd.f32 %v359, %v382
        %s384 = sadd.s32 0, 96
        %s385 = scalar_lea.vmem %s151, %s384 [#allocation6]
        %v386 = vld [vmem:[%s385] sm:$0xff]
        %v387 = vstv %s182
        %v388 = vmul.f32 %v386, %v387
        %v389 = vadd.f32 %v365, %v388
        %v390 = vstv %s197
        %v391 = vmul.f32 %v386, %v390
        %v392 = vadd.f32 %v368, %v391
        %v393 = vstv %s212
        %v394 = vmul.f32 %v386, %v393
        %v395 = vadd.f32 %v371, %v394
        %s396 = sadd.s32 0, 104
        %s397 = scalar_lea.vmem %s151, %s396 [#allocation6]
        %v398 = vld [vmem:[%s397] sm:$0xff]
        %v399 = vstv %s183
        %v400 = vmul.f32 %v398, %v399
        %v401 = vadd.f32 %v377, %v400
        %v402 = vstv %s198
        %v403 = vmul.f32 %v398, %v402
        %v404 = vadd.f32 %v380, %v403
        %v405 = vstv %s213
        %v406 = vmul.f32 %v398, %v405
        %v407 = vadd.f32 %v383, %v406
        %s408 = sadd.s32 0, 112
        %s409 = scalar_lea.vmem %s151, %s408 [#allocation6]
        %v410 = vld [vmem:[%s409] sm:$0xff]
        %v411 = vstv %s184
        %v412 = vmul.f32 %v410, %v411
        %v413 = vadd.f32 %v389, %v412
        %v414 = vstv %s199
        %v415 = vmul.f32 %v410, %v414
        %v416 = vadd.f32 %v392, %v415
        %v417 = vstv %s214
        %v418 = vmul.f32 %v410, %v417
        %v419 = vadd.f32 %v395, %v418
        %s420 = sadd.s32 0, 120
        %s421 = scalar_lea.vmem %s151, %s420 [#allocation6]
        %v422 = vld [vmem:[%s421] sm:$0xff]
        %v423 = vstv %s185
        %v424 = vmul.f32 %v422, %v423
        %v425 = vadd.f32 %v401, %v424
        %v426 = vstv %s200
        %v427 = vmul.f32 %v422, %v426
        %v428 = vadd.f32 %v404, %v427
        %v429 = vstv %s215
        %v430 = vmul.f32 %v422, %v429
        %v431 = vadd.f32 %v407, %v430
        %s432 = sadd.s32 0, 128
        %s433 = scalar_lea.vmem %s151, %s432 [#allocation6]
        %v434 = vld [vmem:[%s433] sm:$0xff]
        %v435 = vstv %s186
        %v436 = vmul.f32 %v434, %v435
        %v437 = vadd.f32 %v413, %v436
        %v438 = vstv %s201
        %v439 = vmul.f32 %v434, %v438
        %v440 = vadd.f32 %v416, %v439
        %v441 = vstv %s216
        %v442 = vmul.f32 %v434, %v441
        %v443 = vadd.f32 %v419, %v442
        %s444 = sadd.s32 0, 136
        %s445 = scalar_lea.vmem %s151, %s444 [#allocation6]
        %v446 = vld [vmem:[%s445] sm:$0xff]
        %v447 = vstv %s187
        %v448 = vmul.f32 %v446, %v447
        %v449 = vadd.f32 %v425, %v448
        %v450 = vstv %s202
        %v451 = vmul.f32 %v446, %v450
        %v452 = vadd.f32 %v428, %v451
        %v453 = vstv %s217
        %v454 = vmul.f32 %v446, %v453
        %v455 = vadd.f32 %v431, %v454
        %v456 = vadd.f32 %v449, %v437
        %v457 = vstv %s218
        %v458 = vadd.f32 %v456, %v457
        %v459 = vmax.f32 %v458, 0.0
        %v460 = vadd.f32 %v452, %v440
        %v461 = vstv %s219
        %v462 = vadd.f32 %v460, %v461
        %v463 = vmax.f32 %v462, 0.0
        %v464 = vadd.f32 %v455, %v443
        %v465 = vstv %s220
        %v466 = vadd.f32 %v464, %v465
        %v467 = vmax.f32 %v466, 0.0
        %v468 = vstv %s224
        %v469 = vmul.f32 %v459, %v468
        %v470 = vstv %s225
        %v471 = vmul.f32 %v463, %v470
        %v472 = vadd.f32 %v469, %v471
        %v473 = vstv %s226
        %v474 = vmul.f32 %v467, %v473
        %v475 = vadd.f32 %v472, %v474
        %v476 = vadd.f32 %v261, %v475
        %477 = vst [vmem:[%s172] sm:$0xff] %v476
        %v478 = vstv %s230
        %v479 = vmul.f32 %v459, %v478
        %v480 = vstv %s231
        %v481 = vmul.f32 %v463, %v480
        %v482 = vadd.f32 %v479, %v481
        %v483 = vstv %s232
        %v484 = vmul.f32 %v467, %v483
        %v485 = vadd.f32 %v482, %v484
        %v486 = vadd.f32 %v271, %v485
        %s487 = scalar_lea.vmem %s172, %s244 [#allocation7]
        %488 = vst [vmem:[%s487] sm:$0xff] %v486
        %v489 = vstv %s236
        %v490 = vmul.f32 %v459, %v489
        %v491 = vstv %s237
        %v492 = vmul.f32 %v463, %v491
        %v493 = vadd.f32 %v490, %v492
        %v494 = vstv %s238
        %v495 = vmul.f32 %v467, %v494
        %v496 = vadd.f32 %v493, %v495
        %v497 = vadd.f32 %v281, %v496
        %s498 = scalar_lea.vmem %s172, %s248 [#allocation7]
        %499 = vst [vmem:[%s498] sm:$0xff] %v497
        %s500 = sand.u32 %s75, 1
        %s501 = scalar_lea.sflag [#allocation4], %s500
        %s502 = sand.u32 %s75, 1
        %s503 = smul.addr %s502, 24
        %s504 = scalar_lea.vmem [#allocation7], %s503
        // Predicated region
        $region37: #{tpu_custom_call.1} parent=27 // pred_check
          %p505 = pneg %p85
        $region38: #{tpu_custom_call.1} parent=27 // pred_check_branch
          %507 = sbr.rel (%p505) target = $region40
        $region39: #{tpu_custom_call.1} parent=27 // pred_region
          %s509 = ssub.s32 384, 384
          %510 = vsyncadd %s501, %s509
          %s511 = smul.addr %s20, 128
          %s512 = scalar_lea.hbm %s2, %s511
          %s513 = sshll.u32 %s504, 4
          %s514 = int_to_ptr.vmem [resolvable:$true] %s513
          %519 = dma.vmem_to_hbm [thread:$0]  %s514, 384, %s512, %s501, 128, 384, 8
        $region40: #{tpu_custom_call.1} parent=27 // pred_fallthru
          _
      $region28: #{tpu_custom_call.1} parent=5 // pred_fallthru
        _
      %p520 = scmp.le.s32.totalorder 2, %s15
      // Predicated region
      $region41: #{tpu_custom_call.1} parent=5 // pred_check
        %p521 = pneg %p520
      $region42: #{tpu_custom_call.1} parent=5 // pred_check_branch
        %523 = sbr.rel (%p521) target = $region44
      $region43: #{tpu_custom_call.1} parent=5 // pred_region
        %s524 = ssub.s32 %s15, 2
        // Predicated region
        $region45: #{tpu_custom_call.1} parent=43 // pred_check
          %p525 = pneg %p91
        $region46: #{tpu_custom_call.1} parent=43 // pred_check_branch
          %527 = sbr.rel (%p525) target = $region48
        $region47: #{tpu_custom_call.1} parent=43 // pred_region
          %s528 = sand.u32 %s76, 1
          %s529 = scalar_lea.sflag [#allocation4], %s528
          %s530 = sand.u32 %s76, 1
          %s531 = smul.addr %s530, 24
          %s532 = scalar_lea.vmem [#allocation7], %s531
          %533 = dma.done %s529, 384
        $region48: #{tpu_custom_call.1} parent=43 // pred_fallthru
          _
      $region44: #{tpu_custom_call.1} parent=5 // pred_fallthru
        _
    $region6: #{tpu_custom_call.1} parent=1 // loop_footer
      %s19 = sadd.s32 1, %s15
    $region7: #{tpu_custom_call.1} parent=1 // loop_footer_branch
      %14 = sbr.rel target = $region3
    $region8: #{tpu_custom_call.1} parent=1 // loop_exit
      _
    %534 = vsyncpa [#allocation3], 1
    %s535 = scalar_lea.sflag [#allocation3], 1
    %536 = vsyncpa %s535, 1
    %537 = vsyncpa [#allocation4], 1
    %s538 = scalar_lea.sflag [#allocation4], 1
    %539 = vsyncpa %s538, 1
    %540 = vsyncpa [#allocation5], 1
    %s541 = scalar_lea.sflag [#allocation5], 1
    %542 = vsyncpa %s541, 1

</llo_original>
